<compile_context>
chip_gen: v5e
topology: v5e:2x2
jax: 0.10.0
libtpu: 0.0.40
codegen_flags: <defaults>
</compile_context>

<pallas_src>
import functools

import jax
import jax.numpy as jnp
from jax.experimental import pallas as pl
from jax.experimental.pallas import tpu as pltpu


def _vmem_capacity_bytes():
    """Physical VMEM per TensorCore; conservative fallback = v7x (64 MiB)."""
    try:
        cap = int(pltpu.get_tpu_info().vmem_capacity_bytes)
        if cap > 0:
            return cap
    except Exception:
        pass
    return 64 * 1024 * 1024


def _num_tensorcores():
    """Best-effort TensorCore count per chip (1 on v5e/v6e, 2 on v7x)."""
    try:
        info = pltpu.get_tpu_info()
        for attr in ("num_cores", "core_count", "tensorcore_count",
                     "num_tensorcores", "num_cores_per_chip"):
            v = getattr(info, attr, None)
            if isinstance(v, int) and v > 0:
                return v
    except Exception:
        pass
    return 1


def _choose_blocks(n_rows, vocab, itemsize, vmem_limit_bytes):
    """Pick (block_rows, block_v) from the VMEM budget (bytes-based)."""
    budget = int(vmem_limit_bytes * 0.8)

    def rows_that_fit(bv):
        # 2 logit inputs x 2 pipeline buffers x bv x itemsize   (DMA buffers)
        # ~5 fp32 (rows, bv) working tiles (casts / exps / selects)
        # + a few fp32 (rows, 1) online-state / accumulator columns
        per_row = 2 * 2 * bv * itemsize + 5 * bv * 4 + 16 * 4
        return budget // max(per_row, 1)

    r_full = rows_that_fit(vocab)
    if r_full >= min(n_rows, 16):
        if r_full >= n_rows:
            return int(n_rows), int(vocab)       # one block covers all rows
        return int(max(16, (r_full // 16) * 16)), int(vocab)

    # Vocab too large for even a 16-row full-V strip -> tile the vocab axis
    # and rely on the in-kernel online-softmax accumulation.
    block_rows = int(min(n_rows, 256))
    if block_rows < n_rows:
        block_rows = max(16, (block_rows // 16) * 16)
    per_lane = block_rows * (2 * 2 * itemsize + 5 * 4)
    bv = budget // max(per_lane, 1)
    bv = int(max(128, (bv // 128) * 128))
    bv = min(bv, int(vocab))
    return block_rows, bv


def _fwd_kl_kernel(labels_ref, s_ref, t_ref, num_ref, den_ref,
                   t_max, t_sum, s_max, s_sum, a_un, b_un,
                   acc_num, acc_den, *,
                   ignore_index, block_rows, block_v, total_rows, total_v,
                   v_ragged):
    p = pl.program_id(0)                     # partition ("parallel")
    r = pl.program_id(1)                     # row-block within partition
    v = pl.program_id(2)                     # vocab strip (innermost reduce)
    r_last = pl.num_programs(1) - 1
    v_last = pl.num_programs(2) - 1

    # Zero the partition-wide accumulators at partition start.
    @pl.when(jnp.logical_and(r == 0, v == 0))
    def _():
        acc_num[...] = jnp.zeros(acc_num.shape, acc_num.dtype)
        acc_den[...] = jnp.zeros(acc_den.shape, acc_den.dtype)

    # Reset per-row online-softmax state at the start of each row block.
    @pl.when(v == 0)
    def _():
        t_max[...] = jnp.full(t_max.shape, -jnp.inf, t_max.dtype)
        s_max[...] = jnp.full(s_max.shape, -jnp.inf, s_max.dtype)
        t_sum[...] = jnp.zeros(t_sum.shape, t_sum.dtype)
        s_sum[...] = jnp.zeros(s_sum.shape, s_sum.dtype)
        a_un[...] = jnp.zeros(a_un.shape, a_un.dtype)
        b_un[...] = jnp.zeros(b_un.shape, b_un.dtype)

    s = s_ref[...].astype(jnp.float32)       # (block_rows, block_v)
    t = t_ref[...].astype(jnp.float32)

    if v_ragged:
        # Ragged vocab tail strip: garbage lanes would corrupt the softmax of
        # valid rows -> mask them to -inf (then exp -> 0 and isinf -> masked).
        lanes = v * block_v + jax.lax.broadcasted_iota(jnp.int32, (1, block_v), 1)
        lane_ok = lanes < total_v
        s = jnp.where(lane_ok, s, -jnp.inf)
        t = jnp.where(lane_ok, t, -jnp.inf)

    new_t_max = jnp.maximum(t_max[...], jnp.max(t, axis=-1, keepdims=True))
    new_s_max = jnp.maximum(s_max[...], jnp.max(s, axis=-1, keepdims=True))
    alpha = jnp.exp(t_max[...] - new_t_max)          # (rows, 1) rescale
    beta = jnp.exp(s_max[...] - new_s_max)           # (rows, 1) rescale

    # Single EUP exp pass per operand over the full tile (CSE'd and reused).
    t_exp = jnp.exp(t - new_t_max)                   # (rows, block_v)
    s_exp = jnp.exp(s - new_s_max)                   # (rows, block_v)

    not_inf = jnp.logical_not(jnp.isinf(s))

    # Online accumulation; per-row scalars stay on (rows, 1) columns.
    t_sum[...] = alpha * t_sum[...] + jnp.sum(t_exp, axis=-1, keepdims=True)
    s_sum[...] = beta * s_sum[...] + jnp.sum(s_exp, axis=-1, keepdims=True)
    # NaN-safe selects (never multiply-by-mask): garbage lanes may hold inf.
    a_un[...] = alpha * a_un[...] + jnp.sum(
        jnp.where(not_inf, t_exp * s, 0.0), axis=-1, keepdims=True)
    b_un[...] = alpha * b_un[...] + jnp.sum(
        jnp.where(not_inf, t_exp, 0.0), axis=-1, keepdims=True)
    t_max[...] = new_t_max
    s_max[...] = new_s_max

    @pl.when(v == v_last)
    def _():
        # Finalize this row block:
        #   x = sum_v softmax(t)[v] * log_softmax(s)[v]   over non-inf lanes
        #     = (A - lse(s) * B) / sum_v exp(t - t_max)
        s_lse = s_max[...] + jnp.log(s_sum[...])                 # (rows, 1)
        x = (a_un[...] - s_lse * b_un[...]) / t_sum[...]         # (rows, 1)

        # Row validity: the *unclamped* global row index must be < total_rows
        # (handles the ragged tail block and clamped duplicate blocks) and the
        # label must not be ignore_index.  Select (not multiply) -> NaN-safe.
        blk = p * pl.num_programs(1) + r
        rows = blk * block_rows + jax.lax.broadcasted_iota(
            jnp.int32, (block_rows, 1), 0)
        lab = labels_ref[...]                                    # (rows, 1)
        valid = jnp.logical_and(rows < total_rows, lab != ignore_index)

        acc_num[...] += jnp.where(valid, x, 0.0)
        acc_den[...] += jnp.where(valid, 1.0, 0.0)

    @pl.when(jnp.logical_and(r == r_last, v == v_last))
    def _():
        # One cross-sublane reduce + one dense (8,128) store per partition.
        num_ref[0] = jnp.full((8, 128), jnp.sum(acc_num[...]), dtype=jnp.float32)
        den_ref[0] = jnp.full((8, 128), jnp.sum(acc_den[...]), dtype=jnp.float32)


def forward_kl_loss(student_logits, teacher_logits, labels, *,
                    normalize=True, ignore_index=-100,
                    block_rows=None, block_v=None):
    """Pallas implementation of torchtune ForwardKLLoss.forward."""
    N, V = student_logits.shape
    assert teacher_logits.shape == (N, V)
    labels = labels.reshape(-1).astype(jnp.int32)
    assert labels.shape[0] == N
    labels2d = labels.reshape(N, 1)

    itemsize = jnp.dtype(student_logits.dtype).itemsize
    vmem_cap = _vmem_capacity_bytes()
    vmem_limit = min(vmem_cap * 3 // 4, 96 * 1024 * 1024)

    auto_rows, auto_v = _choose_blocks(N, V, itemsize, vmem_limit)
    block_rows = int(block_rows) if block_rows is not None else auto_rows
    block_v = int(block_v) if block_v is not None else auto_v

    # Validate explicit block sizes against TPU min-tile constraints
    # (conservative: multiple of 16 rows covers both f32 and bf16 packing).
    if block_rows != N:
        assert block_rows % 16 == 0, "block_rows must be a multiple of 16 or == N"
    if block_v != V:
        assert block_v % 128 == 0, "block_v must be a multiple of 128 or == V"

    nblocks = pl.cdiv(N, block_rows)
    v_steps = pl.cdiv(V, block_v)
    v_ragged = (V % block_v) != 0

    # Only split across partitions when the chip actually has >1 TensorCore
    # (v7x); on v5e/v6e the outer axis would just be a serial loop plus a
    # wasted duplicate block when nblocks is odd.
    ncores = _num_tensorcores()
    if ncores >= 2 and nblocks >= 2 and (nblocks % 2 == 0 or nblocks >= 8):
        parts = 2
    else:
        parts = 1
    inner = pl.cdiv(nblocks, parts)

    def row_map(p, r, v):
        # Clamp so DMAs never start past the array; duplicated blocks are
        # masked to zero inside the kernel via the unclamped row index.
        return (jnp.minimum(p * inner + r, nblocks - 1), v)

    def label_map(p, r, v):
        return (jnp.minimum(p * inner + r, nblocks - 1), 0)

    kernel = functools.partial(
        _fwd_kl_kernel,
        ignore_index=ignore_index,
        block_rows=block_rows,
        block_v=block_v,
        total_rows=N,
        total_v=V,
        v_ragged=v_ragged,
    )

    col = lambda: pltpu.VMEM((block_rows, 1), jnp.float32)

    num_out, den_out = pl.pallas_call(
        kernel,
        out_shape=(
            jax.ShapeDtypeStruct((parts, 8, 128), jnp.float32),
            jax.ShapeDtypeStruct((parts, 8, 128), jnp.float32),
        ),
        grid_spec=pltpu.PrefetchScalarGridSpec(
            num_scalar_prefetch=0,
            grid=(parts, inner, v_steps),
            in_specs=[
                pl.BlockSpec((block_rows, 1), label_map),      # labels
                pl.BlockSpec((block_rows, block_v), row_map),  # student logits
                pl.BlockSpec((block_rows, block_v), row_map),  # teacher logits
            ],
            out_specs=[
                pl.BlockSpec((1, 8, 128), lambda p, r, v: (p, 0, 0)),
                pl.BlockSpec((1, 8, 128), lambda p, r, v: (p, 0, 0)),
            ],
            scratch_shapes=[
                col(),  # t_max
                col(),  # t_sum
                col(),  # s_max
                col(),  # s_sum
                col(),  # a_un
                col(),  # b_un
                col(),  # acc_num
                col(),  # acc_den
            ],
        ),
        compiler_params=pltpu.CompilerParams(
            dimension_semantics=("parallel", "arbitrary", "arbitrary"),
            vmem_limit_bytes=int(vmem_limit),
        ),
    )(labels2d, student_logits, teacher_logits)

    num = jnp.sum(num_out[:, 0, 0])
    den = jnp.sum(den_out[:, 0, 0])
    if not normalize:
        return -num
    # sum_masks == 0 -> return 0.0
    return jnp.where(den == 0, jnp.float32(0.0), -num / jnp.maximum(den, 1.0))


def _reference(student, teacher, labels, normalize=True, ignore_index=-100):
    s = student.astype(jnp.float32)
    t = teacher.astype(jnp.float32)
    t_prob = jax.nn.softmax(t, axis=-1)
    s_logp = jax.nn.log_softmax(s, axis=-1)
    prod = jnp.where(jnp.isinf(s), 0.0, t_prob * s_logp)
    x = jnp.sum(prod, axis=-1)
    mask = (labels.reshape(-1) != ignore_index).astype(jnp.float32)
    if not normalize:
        return -jnp.sum(x * mask)
    sm = jnp.sum(mask)
    return jnp.where(sm == 0, jnp.float32(0.0), -jnp.sum(x * mask) / sm)


if __name__ == "__main__":
    key = jax.random.PRNGKey(0)
    ks = jax.random.split(key, 12)

    # --- test 1: small f32, single block (batch=2, seq=8, vocab=128) -------
    batch, seq, vocab = 2, 8, 128
    N1 = batch * seq
    s1 = jax.random.normal(ks[0], (N1, vocab), dtype=jnp.float32)
    t1 = jax.random.normal(ks[1], (N1, vocab), dtype=jnp.float32)
    l1 = jax.random.randint(ks[2], (N1,), 0, vocab, dtype=jnp.int32)
    l1 = l1.at[0].set(-100).at[5].set(-100)

    out1 = forward_kl_loss(s1, t1, l1, normalize=True)
    jax.block_until_ready(out1)
    ref1 = _reference(s1, t1, l1, normalize=True)
    assert jnp.allclose(out1, ref1, rtol=1e-5, atol=1e-6), (out1, ref1)

    out1b = forward_kl_loss(s1, t1, l1, normalize=False)
    ref1b = _reference(s1, t1, l1, normalize=False)
    assert jnp.allclose(out1b, ref1b, rtol=1e-5, atol=1e-6), (out1b, ref1b)

    # --- test 2: bf16 inputs, many row blocks --------------------------------
    N2, V2 = 144, 256
    s2 = jax.random.normal(ks[3], (N2, V2), dtype=jnp.bfloat16)
    t2 = jax.random.normal(ks[4], (N2, V2), dtype=jnp.bfloat16)
    l2 = jax.random.randint(ks[5], (N2,), 0, V2, dtype=jnp.int32)
    l2 = l2.at[3].set(-100).at[77].set(-100).at[143].set(-100)

    out2 = forward_kl_loss(s2, t2, l2, normalize=True, block_rows=16)
    jax.block_until_ready(out2)
    ref2 = _reference(s2, t2, l2, normalize=True)
    assert jnp.allclose(out2, ref2, rtol=1e-4, atol=1e-5), (out2, ref2)

    # --- test 3: ragged N (partial tail row block is masked, no padding) ----
    N3, V3 = 40, 128
    s3 = jax.random.normal(ks[6], (N3, V3), dtype=jnp.float32)
    t3 = jax.random.normal(ks[7], (N3, V3), dtype=jnp.float32)
    l3 = jax.random.randint(ks[8], (N3,), 0, V3, dtype=jnp.int32)
    l3 = l3.at[10].set(-100)

    out3 = forward_kl_loss(s3, t3, l3, normalize=True, block_rows=16)
    jax.block_until_ready(out3)
    ref3 = _reference(s3, t3, l3, normalize=True)
    assert jnp.allclose(out3, ref3, rtol=1e-5, atol=1e-6), (out3, ref3)

    # --- test 4: multiple vocab strips (online-softmax path), even split ----
    N4, V4 = 24, 384
    s4 = jax.random.normal(ks[9], (N4, V4), dtype=jnp.float32)
    t4 = jax.random.normal(ks[10], (N4, V4), dtype=jnp.float32)
    l4 = jax.random.randint(ks[11], (N4,), 0, V4, dtype=jnp.int32)
    l4 = l4.at[2].set(-100)

    out4 = forward_kl_loss(s4, t4, l4, normalize=True, block_v=128)
    jax.block_until_ready(out4)
    ref4 = _reference(s4, t4, l4, normalize=True)
    assert jnp.allclose(out4, ref4, rtol=1e-5, atol=1e-6), (out4, ref4)

    # --- test 5: ragged vocab tail strip + ragged rows ------------------------
    N5, V5 = 40, 200
    s5 = jax.random.normal(ks[0], (N5, V5), dtype=jnp.float32)
    t5 = jax.random.normal(ks[1], (N5, V5), dtype=jnp.float32)
    l5 = jax.random.randint(ks[2], (N5,), 0, V5, dtype=jnp.int32)
    l5 = l5.at[7].set(-100)

    out5 = forward_kl_loss(s5, t5, l5, normalize=True,
                           block_rows=16, block_v=128)
    jax.block_until_ready(out5)
    ref5 = _reference(s5, t5, l5, normalize=True)
    assert jnp.allclose(out5, ref5, rtol=1e-5, atol=1e-6), (out5, ref5)

    # --- test 6: all labels ignored -> 0.0 -----------------------------------
    l6 = jnp.full((N1,), -100, dtype=jnp.int32)
    out6 = forward_kl_loss(s1, t1, l6, normalize=True)
    jax.block_until_ready(out6)
    assert jnp.allclose(out6, 0.0, atol=1e-7), out6

    print("KERNEL_OK")
</pallas_src>

<mosaic_0001>
module attributes {stable_mosaic.version = 11 : i64} {
  func.func @_fwd_kl_kernel(%arg0: i32, %arg1: i32, %arg2: i32, %arg3: memref<16x1xi32, #tpu.memory_space<vmem>>, %arg4: memref<16x128xf32, #tpu.memory_space<vmem>>, %arg5: memref<16x128xf32, #tpu.memory_space<vmem>>, %arg6: memref<1x8x128xf32, #tpu.memory_space<vmem>>, %arg7: memref<1x8x128xf32, #tpu.memory_space<vmem>>, %arg8: memref<16x1xf32, #tpu.memory_space<vmem>>, %arg9: memref<16x1xf32, #tpu.memory_space<vmem>>, %arg10: memref<16x1xf32, #tpu.memory_space<vmem>>, %arg11: memref<16x1xf32, #tpu.memory_space<vmem>>, %arg12: memref<16x1xf32, #tpu.memory_space<vmem>>, %arg13: memref<16x1xf32, #tpu.memory_space<vmem>>, %arg14: memref<16x1xf32, #tpu.memory_space<vmem>>, %arg15: memref<16x1xf32, #tpu.memory_space<vmem>>) attributes {dimension_semantics = [#tpu.dimension_semantics<parallel>, #tpu.dimension_semantics<arbitrary>, #tpu.dimension_semantics<arbitrary>], iteration_bounds = array<i64: 1, 1, 1>, scalar_prefetch = 0 : i64, scratch_operands = 8 : i64, tpu.core_type = #tpu.core_type<tc>, window_params = [{transform_indices = @transform_0, window_bounds = array<i64: 16, 1>}, {transform_indices = @transform_1, window_bounds = array<i64: 16, 128>}, {transform_indices = @transform_2, window_bounds = array<i64: 16, 128>}, {transform_indices = @transform_3, window_bounds = array<i64: 1, 8, 128>}, {transform_indices = @transform_4, window_bounds = array<i64: 1, 8, 128>}]} {
    %c0_i32 = arith.constant 0 : i32
    %0 = arith.cmpi eq, %arg1, %c0_i32 : i32
    %c0_i32_0 = arith.constant 0 : i32
    %1 = arith.cmpi eq, %arg2, %c0_i32_0 : i32
    %2 = arith.andi %0, %1 : i1
    %3 = arith.extui %2 : i1 to i32
    %c0_i32_1 = arith.constant 0 : i32
    %4 = arith.cmpi ne, %3, %c0_i32_1 : i32
    scf.if %4 {
      %cst_49 = arith.constant 0.000000e+00 : f32
      %73 = vector.broadcast %cst_49 : f32 to vector<16x1xf32>
      %c0_50 = arith.constant 0 : index
      %c0_51 = arith.constant 0 : index
      %74 = vector.load %arg14[%c0_50, %c0_51] : memref<16x1xf32, #tpu.memory_space<vmem>>, vector<16x1xf32>
      tpu.vector_store %arg14[%c0_50, %c0_51], %73 {strides = array<i32>} : memref<16x1xf32, #tpu.memory_space<vmem>>, vector<16x1xf32>,
      %cst_52 = arith.constant 0.000000e+00 : f32
      %75 = vector.broadcast %cst_52 : f32 to vector<16x1xf32>
      %c0_53 = arith.constant 0 : index
      %c0_54 = arith.constant 0 : index
      %76 = vector.load %arg15[%c0_53, %c0_54] : memref<16x1xf32, #tpu.memory_space<vmem>>, vector<16x1xf32>
      tpu.vector_store %arg15[%c0_53, %c0_54], %75 {strides = array<i32>} : memref<16x1xf32, #tpu.memory_space<vmem>>, vector<16x1xf32>,
    } else {
    }
    %c0_i32_2 = arith.constant 0 : i32
    %5 = arith.cmpi eq, %arg2, %c0_i32_2 : i32
    %6 = arith.extui %5 : i1 to i32
    %c0_i32_3 = arith.constant 0 : i32
    %7 = arith.cmpi ne, %6, %c0_i32_3 : i32
    scf.if %7 {
      %cst_49 = arith.constant 0xFF800000 : f32
      %73 = vector.broadcast %cst_49 : f32 to vector<16x1xf32>
      %c0_50 = arith.constant 0 : index
      %c0_51 = arith.constant 0 : index
      %74 = vector.load %arg8[%c0_50, %c0_51] : memref<16x1xf32, #tpu.memory_space<vmem>>, vector<16x1xf32>
      tpu.vector_store %arg8[%c0_50, %c0_51], %73 {strides = array<i32>} : memref<16x1xf32, #tpu.memory_space<vmem>>, vector<16x1xf32>,
      %cst_52 = arith.constant 0xFF800000 : f32
      %75 = vector.broadcast %cst_52 : f32 to vector<16x1xf32>
      %c0_53 = arith.constant 0 : index
      %c0_54 = arith.constant 0 : index
      %76 = vector.load %arg10[%c0_53, %c0_54] : memref<16x1xf32, #tpu.memory_space<vmem>>, vector<16x1xf32>
      tpu.vector_store %arg10[%c0_53, %c0_54], %75 {strides = array<i32>} : memref<16x1xf32, #tpu.memory_space<vmem>>, vector<16x1xf32>,
      %cst_55 = arith.constant 0.000000e+00 : f32
      %77 = vector.broadcast %cst_55 : f32 to vector<16x1xf32>
      %c0_56 = arith.constant 0 : index
      %c0_57 = arith.constant 0 : index
      %78 = vector.load %arg9[%c0_56, %c0_57] : memref<16x1xf32, #tpu.memory_space<vmem>>, vector<16x1xf32>
      tpu.vector_store %arg9[%c0_56, %c0_57], %77 {strides = array<i32>} : memref<16x1xf32, #tpu.memory_space<vmem>>, vector<16x1xf32>,
      %cst_58 = arith.constant 0.000000e+00 : f32
      %79 = vector.broadcast %cst_58 : f32 to vector<16x1xf32>
      %c0_59 = arith.constant 0 : index
      %c0_60 = arith.constant 0 : index
      %80 = vector.load %arg11[%c0_59, %c0_60] : memref<16x1xf32, #tpu.memory_space<vmem>>, vector<16x1xf32>
      tpu.vector_store %arg11[%c0_59, %c0_60], %79 {strides = array<i32>} : memref<16x1xf32, #tpu.memory_space<vmem>>, vector<16x1xf32>,
      %cst_61 = arith.constant 0.000000e+00 : f32
      %81 = vector.broadcast %cst_61 : f32 to vector<16x1xf32>
      %c0_62 = arith.constant 0 : index
      %c0_63 = arith.constant 0 : index
      %82 = vector.load %arg12[%c0_62, %c0_63] : memref<16x1xf32, #tpu.memory_space<vmem>>, vector<16x1xf32>
      tpu.vector_store %arg12[%c0_62, %c0_63], %81 {strides = array<i32>} : memref<16x1xf32, #tpu.memory_space<vmem>>, vector<16x1xf32>,
      %cst_64 = arith.constant 0.000000e+00 : f32
      %83 = vector.broadcast %cst_64 : f32 to vector<16x1xf32>
      %c0_65 = arith.constant 0 : index
      %c0_66 = arith.constant 0 : index
      %84 = vector.load %arg13[%c0_65, %c0_66] : memref<16x1xf32, #tpu.memory_space<vmem>>, vector<16x1xf32>
      tpu.vector_store %arg13[%c0_65, %c0_66], %83 {strides = array<i32>} : memref<16x1xf32, #tpu.memory_space<vmem>>, vector<16x1xf32>,
    } else {
    }
    %c0 = arith.constant 0 : index
    %c0_4 = arith.constant 0 : index
    %8 = vector.load %arg4[%c0, %c0_4] : memref<16x128xf32, #tpu.memory_space<vmem>>, vector<16x128xf32>
    %c0_5 = arith.constant 0 : index
    %c0_6 = arith.constant 0 : index
    %9 = vector.load %arg5[%c0_5, %c0_6] : memref<16x128xf32, #tpu.memory_space<vmem>>, vector<16x128xf32>
    %c0_7 = arith.constant 0 : index
    %c0_8 = arith.constant 0 : index
    %10 = vector.load %arg8[%c0_7, %c0_8] : memref<16x1xf32, #tpu.memory_space<vmem>>, vector<16x1xf32>
    %cst = arith.constant dense<0xFF800000> : vector<16xf32>
    %11 = vector.multi_reduction <maximumf>, %9, %cst [1] : vector<16x128xf32> to vector<16xf32>
    %12 = vector.shape_cast %11 : vector<16xf32> to vector<16x1xf32>
    %13 = arith.maximumf %10, %12 : vector<16x1xf32>
    %c0_9 = arith.constant 0 : index
    %c0_10 = arith.constant 0 : index
    %14 = vector.load %arg10[%c0_9, %c0_10] : memref<16x1xf32, #tpu.memory_space<vmem>>, vector<16x1xf32>
    %cst_11 = arith.constant dense<0xFF800000> : vector<16xf32>
    %15 = vector.multi_reduction <maximumf>, %8, %cst_11 [1] : vector<16x128xf32> to vector<16xf32>
    %16 = vector.shape_cast %15 : vector<16xf32> to vector<16x1xf32>
    %17 = arith.maximumf %14, %16 : vector<16x1xf32>
    %c0_12 = arith.constant 0 : index
    %c0_13 = arith.constant 0 : index
    %18 = vector.load %arg8[%c0_12, %c0_13] : memref<16x1xf32, #tpu.memory_space<vmem>>, vector<16x1xf32>
    %19 = arith.subf %18, %13 : vector<16x1xf32>
    %20 = math.exp %19 : vector<16x1xf32>
    %c0_14 = arith.constant 0 : index
    %c0_15 = arith.constant 0 : index
    %21 = vector.load %arg10[%c0_14, %c0_15] : memref<16x1xf32, #tpu.memory_space<vmem>>, vector<16x1xf32>
    %22 = arith.subf %21, %17 : vector<16x1xf32>
    %23 = math.exp %22 : vector<16x1xf32>
    %24 = vector.broadcast %13 : vector<16x1xf32> to vector<16x128xf32>
    %25 = arith.subf %9, %24 : vector<16x128xf32>
    %26 = math.exp %25 : vector<16x128xf32>
    %27 = vector.broadcast %17 : vector<16x1xf32> to vector<16x128xf32>
    %28 = arith.subf %8, %27 : vector<16x128xf32>
    %29 = math.exp %28 : vector<16x128xf32>
    %30 = math.absf %8 : vector<16x128xf32>
    %cst_16 = arith.constant 0x7F800000 : f32
    %31 = vector.broadcast %cst_16 : f32 to vector<16x128xf32>
    %32 = arith.cmpf oeq, %30, %31 : vector<16x128xf32>
    %cst_17 = arith.constant dense<true> : vector<16x128xi1>
    %33 = arith.xori %32, %cst_17 : vector<16x128xi1>
    %c0_18 = arith.constant 0 : index
    %c0_19 = arith.constant 0 : index
    %34 = vector.load %arg9[%c0_18, %c0_19] : memref<16x1xf32, #tpu.memory_space<vmem>>, vector<16x1xf32>
    %35 = arith.mulf %20, %34 : vector<16x1xf32>
    %cst_20 = arith.constant dense<0.000000e+00> : vector<16xf32>
    %36 = vector.multi_reduction <add>, %26, %cst_20 [1] : vector<16x128xf32> to vector<16xf32>
    %37 = vector.shape_cast %36 : vector<16xf32> to vector<16x1xf32>
    %38 = arith.addf %35, %37 : vector<16x1xf32>
    %c0_21 = arith.constant 0 : index
    %c0_22 = arith.constant 0 : index
    %39 = vector.load %arg9[%c0_21, %c0_22] : memref<16x1xf32, #tpu.memory_space<vmem>>, vector<16x1xf32>
    tpu.vector_store %arg9[%c0_21, %c0_22], %38 {strides = array<i32>} : memref<16x1xf32, #tpu.memory_space<vmem>>, vector<16x1xf32>,
    %c0_23 = arith.constant 0 : index
    %c0_24 = arith.constant 0 : index
    %40 = vector.load %arg11[%c0_23, %c0_24] : memref<16x1xf32, #tpu.memory_space<vmem>>, vector<16x1xf32>
    %41 = arith.mulf %23, %40 : vector<16x1xf32>
    %cst_25 = arith.constant dense<0.000000e+00> : vector<16xf32>
    %42 = vector.multi_reduction <add>, %29, %cst_25 [1] : vector<16x128xf32> to vector<16xf32>
    %43 = vector.shape_cast %42 : vector<16xf32> to vector<16x1xf32>
    %44 = arith.addf %41, %43 : vector<16x1xf32>
    %c0_26 = arith.constant 0 : index
    %c0_27 = arith.constant 0 : index
    %45 = vector.load %arg11[%c0_26, %c0_27] : memref<16x1xf32, #tpu.memory_space<vmem>>, vector<16x1xf32>
    tpu.vector_store %arg11[%c0_26, %c0_27], %44 {strides = array<i32>} : memref<16x1xf32, #tpu.memory_space<vmem>>, vector<16x1xf32>,
    %c0_28 = arith.constant 0 : index
    %c0_29 = arith.constant 0 : index
    %46 = vector.load %arg12[%c0_28, %c0_29] : memref<16x1xf32, #tpu.memory_space<vmem>>, vector<16x1xf32>
    %47 = arith.mulf %20, %46 : vector<16x1xf32>
    %48 = arith.mulf %26, %8 : vector<16x128xf32>
    %cst_30 = arith.constant 0.000000e+00 : f32
    %49 = vector.broadcast %cst_30 : f32 to vector<16x128xf32>
    %50 = arith.select %33, %48, %49 : vector<16x128xi1>, vector<16x128xf32>
    %cst_31 = arith.constant dense<0.000000e+00> : vector<16xf32>
    %51 = vector.multi_reduction <add>, %50, %cst_31 [1] : vector<16x128xf32> to vector<16xf32>
    %52 = vector.shape_cast %51 : vector<16xf32> to vector<16x1xf32>
    %53 = arith.addf %47, %52 : vector<16x1xf32>
    %c0_32 = arith.constant 0 : index
    %c0_33 = arith.constant 0 : index
    %54 = vector.load %arg12[%c0_32, %c0_33] : memref<16x1xf32, #tpu.memory_space<vmem>>, vector<16x1xf32>
    tpu.vector_store %arg12[%c0_32, %c0_33], %53 {strides = array<i32>} : memref<16x1xf32, #tpu.memory_space<vmem>>, vector<16x1xf32>,
    %c0_34 = arith.constant 0 : index
    %c0_35 = arith.constant 0 : index
    %55 = vector.load %arg13[%c0_34, %c0_35] : memref<16x1xf32, #tpu.memory_space<vmem>>, vector<16x1xf32>
    %56 = arith.mulf %20, %55 : vector<16x1xf32>
    %cst_36 = arith.constant 0.000000e+00 : f32
    %57 = vector.broadcast %cst_36 : f32 to vector<16x128xf32>
    %58 = arith.select %33, %26, %57 : vector<16x128xi1>, vector<16x128xf32>
    %cst_37 = arith.constant dense<0.000000e+00> : vector<16xf32>
    %59 = vector.multi_reduction <add>, %58, %cst_37 [1] : vector<16x128xf32> to vector<16xf32>
    %60 = vector.shape_cast %59 : vector<16xf32> to vector<16x1xf32>
    %61 = arith.addf %56, %60 : vector<16x1xf32>
    %c0_38 = arith.constant 0 : index
    %c0_39 = arith.constant 0 : index
    %62 = vector.load %arg13[%c0_38, %c0_39] : memref<16x1xf32, #tpu.memory_space<vmem>>, vector<16x1xf32>
    tpu.vector_store %arg13[%c0_38, %c0_39], %61 {strides = array<i32>} : memref<16x1xf32, #tpu.memory_space<vmem>>, vector<16x1xf32>,
    %c0_40 = arith.constant 0 : index
    %c0_41 = arith.constant 0 : index
    %63 = vector.load %arg8[%c0_40, %c0_41] : memref<16x1xf32, #tpu.memory_space<vmem>>, vector<16x1xf32>
    tpu.vector_store %arg8[%c0_40, %c0_41], %13 {strides = array<i32>} : memref<16x1xf32, #tpu.memory_space<vmem>>, vector<16x1xf32>,
    %c0_42 = arith.constant 0 : index
    %c0_43 = arith.constant 0 : index
    %64 = vector.load %arg10[%c0_42, %c0_43] : memref<16x1xf32, #tpu.memory_space<vmem>>, vector<16x1xf32>
    tpu.vector_store %arg10[%c0_42, %c0_43], %17 {strides = array<i32>} : memref<16x1xf32, #tpu.memory_space<vmem>>, vector<16x1xf32>,
    %c0_i32_44 = arith.constant 0 : i32
    %65 = arith.cmpi eq, %arg2, %c0_i32_44 : i32
    %66 = arith.extui %65 : i1 to i32
    %c0_i32_45 = arith.constant 0 : i32
    %67 = arith.cmpi ne, %66, %c0_i32_45 : i32
    scf.if %67 {
      %c0_49 = arith.constant 0 : index
      %c0_50 = arith.constant 0 : index
      %73 = vector.load %arg10[%c0_49, %c0_50] : memref<16x1xf32, #tpu.memory_space<vmem>>, vector<16x1xf32>
      %c0_51 = arith.constant 0 : index
      %c0_52 = arith.constant 0 : index
      %74 = vector.load %arg11[%c0_51, %c0_52] : memref<16x1xf32, #tpu.memory_space<vmem>>, vector<16x1xf32>
      %75 = math.log %74 : vector<16x1xf32>
      %76 = arith.addf %73, %75 : vector<16x1xf32>
      %c0_53 = arith.constant 0 : index
      %c0_54 = arith.constant 0 : index
      %77 = vector.load %arg12[%c0_53, %c0_54] : memref<16x1xf32, #tpu.memory_space<vmem>>, vector<16x1xf32>
      %c0_55 = arith.constant 0 : index
      %c0_56 = arith.constant 0 : index
      %78 = vector.load %arg13[%c0_55, %c0_56] : memref<16x1xf32, #tpu.memory_space<vmem>>, vector<16x1xf32>
      %79 = arith.mulf %76, %78 : vector<16x1xf32>
      %80 = arith.subf %77, %79 : vector<16x1xf32>
      %c0_57 = arith.constant 0 : index
      %c0_58 = arith.constant 0 : index
      %81 = vector.load %arg9[%c0_57, %c0_58] : memref<16x1xf32, #tpu.memory_space<vmem>>, vector<16x1xf32>
      %82 = arith.divf %80, %81 : vector<16x1xf32>
      %c1_i32 = arith.constant 1 : i32
      %83 = arith.muli %arg0, %c1_i32 : i32
      %84 = arith.addi %83, %arg1 : i32
      %c16_i32 = arith.constant 16 : i32
      %85 = arith.muli %84, %c16_i32 : i32
      %86 = tpu.iota {dimensions = array<i32: 0>} : vector<16x1xi32>
      %87 = vector.broadcast %85 : i32 to vector<16x1xi32>
      %88 = arith.addi %87, %86 : vector<16x1xi32>
      %c0_59 = arith.constant 0 : index
      %c0_60 = arith.constant 0 : index
      %89 = vector.load %arg3[%c0_59, %c0_60] : memref<16x1xi32, #tpu.memory_space<vmem>>, vector<16x1xi32>
      %c16_i32_61 = arith.constant 16 : i32
      %90 = vector.broadcast %c16_i32_61 : i32 to vector<16x1xi32>
      %91 = arith.cmpi slt, %88, %90 : vector<16x1xi32>
      %c-100_i32 = arith.constant -100 : i32
      %92 = vector.broadcast %c-100_i32 : i32 to vector<16x1xi32>
      %93 = arith.cmpi ne, %89, %92 : vector<16x1xi32>
      %94 = arith.andi %91, %93 : vector<16x1xi1>
      %c0_62 = arith.constant 0 : index
      %c0_63 = arith.constant 0 : index
      %95 = vector.load %arg14[%c0_62, %c0_63] : memref<16x1xf32, #tpu.memory_space<vmem>>, vector<16x1xf32>
      %cst_64 = arith.constant 0.000000e+00 : f32
      %96 = vector.broadcast %cst_64 : f32 to vector<16x1xf32>
      %97 = arith.select %94, %82, %96 : vector<16x1xi1>, vector<16x1xf32>
      %98 = arith.addf %95, %97 : vector<16x1xf32>
      %c0_65 = arith.constant 0 : index
      %c0_66 = arith.constant 0 : index
      %99 = vector.load %arg14[%c0_65, %c0_66] : memref<16x1xf32, #tpu.memory_space<vmem>>, vector<16x1xf32>
      tpu.vector_store %arg14[%c0_65, %c0_66], %98 {strides = array<i32>} : memref<16x1xf32, #tpu.memory_space<vmem>>, vector<16x1xf32>,
      %c0_67 = arith.constant 0 : index
      %c0_68 = arith.constant 0 : index
      %100 = vector.load %arg15[%c0_67, %c0_68] : memref<16x1xf32, #tpu.memory_space<vmem>>, vector<16x1xf32>
      %cst_69 = arith.constant 1.000000e+00 : f32
      %cst_70 = arith.constant 0.000000e+00 : f32
      %101 = vector.broadcast %cst_69 : f32 to vector<16x1xf32>
      %102 = vector.broadcast %cst_70 : f32 to vector<16x1xf32>
      %103 = arith.select %94, %101, %102 : vector<16x1xi1>, vector<16x1xf32>
      %104 = arith.addf %100, %103 : vector<16x1xf32>
      %c0_71 = arith.constant 0 : index
      %c0_72 = arith.constant 0 : index
      %105 = vector.load %arg15[%c0_71, %c0_72] : memref<16x1xf32, #tpu.memory_space<vmem>>, vector<16x1xf32>
      tpu.vector_store %arg15[%c0_71, %c0_72], %104 {strides = array<i32>} : memref<16x1xf32, #tpu.memory_space<vmem>>, vector<16x1xf32>,
    } else {
    }
    %c0_i32_46 = arith.constant 0 : i32
    %68 = arith.cmpi eq, %arg1, %c0_i32_46 : i32
    %c0_i32_47 = arith.constant 0 : i32
    %69 = arith.cmpi eq, %arg2, %c0_i32_47 : i32
    %70 = arith.andi %68, %69 : i1
    %71 = arith.extui %70 : i1 to i32
    %c0_i32_48 = arith.constant 0 : i32
    %72 = arith.cmpi ne, %71, %c0_i32_48 : i32
    scf.if %72 {
      %c0_49 = arith.constant 0 : index
      %c0_50 = arith.constant 0 : index
      %73 = vector.load %arg14[%c0_49, %c0_50] : memref<16x1xf32, #tpu.memory_space<vmem>>, vector<16x1xf32>
      %74 = vector.shape_cast %73 : vector<16x1xf32> to vector<1x16x1xf32>
      %cst_51 = arith.constant dense<0.000000e+00> : vector<1xf32>
      %75 = vector.multi_reduction <add>, %74, %cst_51 [1, 2] : vector<1x16x1xf32> to vector<1xf32>
      %76 = vector.shape_cast %75 : vector<1xf32> to vector<1x1x1xf32>
      %77 = vector.extract %76[0, 0, 0] : f32 from vector<1x1x1xf32>
      %78 = vector.broadcast %77 : f32 to vector<8x128xf32>
      %c0_52 = arith.constant 0 : index
      %c0_53 = arith.constant 0 : index
      %c0_54 = arith.constant 0 : index
      %79 = vector.load %arg6[%c0_52, %c0_53, %c0_54] : memref<1x8x128xf32, #tpu.memory_space<vmem>>, vector<1x8x128xf32>
      %80 = vector.shape_cast %79 : vector<1x8x128xf32> to vector<8x128xf32>
      %81 = vector.shape_cast %78 : vector<8x128xf32> to vector<1x8x128xf32>
      tpu.vector_store %arg6[%c0_52, %c0_53, %c0_54], %81 {strides = array<i32>} : memref<1x8x128xf32, #tpu.memory_space<vmem>>, vector<1x8x128xf32>,
      %c0_55 = arith.constant 0 : index
      %c0_56 = arith.constant 0 : index
      %82 = vector.load %arg15[%c0_55, %c0_56] : memref<16x1xf32, #tpu.memory_space<vmem>>, vector<16x1xf32>
      %83 = vector.shape_cast %82 : vector<16x1xf32> to vector<1x16x1xf32>
      %cst_57 = arith.constant dense<0.000000e+00> : vector<1xf32>
      %84 = vector.multi_reduction <add>, %83, %cst_57 [1, 2] : vector<1x16x1xf32> to vector<1xf32>
      %85 = vector.shape_cast %84 : vector<1xf32> to vector<1x1x1xf32>
      %86 = vector.extract %85[0, 0, 0] : f32 from vector<1x1x1xf32>
      %87 = vector.broadcast %86 : f32 to vector<8x128xf32>
      %c0_58 = arith.constant 0 : index
      %c0_59 = arith.constant 0 : index
      %c0_60 = arith.constant 0 : index
      %88 = vector.load %arg7[%c0_58, %c0_59, %c0_60] : memref<1x8x128xf32, #tpu.memory_space<vmem>>, vector<1x8x128xf32>
      %89 = vector.shape_cast %88 : vector<1x8x128xf32> to vector<8x128xf32>
      %90 = vector.shape_cast %87 : vector<8x128xf32> to vector<1x8x128xf32>
      tpu.vector_store %arg7[%c0_58, %c0_59, %c0_60], %90 {strides = array<i32>} : memref<1x8x128xf32, #tpu.memory_space<vmem>>, vector<1x8x128xf32>,
    } else {
    }
    return
  }
  func.func @transform_0(%arg0: i32, %arg1: i32, %arg2: i32) -> (i32, i32) {
    %c1_i32 = arith.constant 1 : i32
    %0 = arith.muli %arg0, %c1_i32 : i32
    %1 = arith.addi %0, %arg1 : i32
    %c0_i32 = arith.constant 0 : i32
    %2 = arith.minsi %1, %c0_i32 : i32
    %c0_i32_0 = arith.constant 0 : i32
    %c0_i32_1 = arith.constant 0 : i32
    return %2, %c0_i32_0 : i32, i32
  }
  func.func @transform_1(%arg0: i32, %arg1: i32, %arg2: i32) -> (i32, i32) {
    %c1_i32 = arith.constant 1 : i32
    %0 = arith.muli %arg0, %c1_i32 : i32
    %1 = arith.addi %0, %arg1 : i32
    %c0_i32 = arith.constant 0 : i32
    %2 = arith.minsi %1, %c0_i32 : i32
    %c0_i32_0 = arith.constant 0 : i32
    return %2, %arg2 : i32, i32
  }
  func.func @transform_2(%arg0: i32, %arg1: i32, %arg2: i32) -> (i32, i32) {
    %c1_i32 = arith.constant 1 : i32
    %0 = arith.muli %arg0, %c1_i32 : i32
    %1 = arith.addi %0, %arg1 : i32
    %c0_i32 = arith.constant 0 : i32
    %2 = arith.minsi %1, %c0_i32 : i32
    %c0_i32_0 = arith.constant 0 : i32
    return %2, %arg2 : i32, i32
  }
  func.func @transform_3(%arg0: i32, %arg1: i32, %arg2: i32) -> (i32, i32, i32) {
    %c0_i32 = arith.constant 0 : i32
    %c0_i32_0 = arith.constant 0 : i32
    %c0_i32_1 = arith.constant 0 : i32
    return %arg0, %c0_i32, %c0_i32_0 : i32, i32, i32
  }
  func.func @transform_4(%arg0: i32, %arg1: i32, %arg2: i32) -> (i32, i32, i32) {
    %c0_i32 = arith.constant 0 : i32
    %c0_i32_0 = arith.constant 0 : i32
    %c0_i32_1 = arith.constant 0 : i32
    return %arg0, %c0_i32, %c0_i32_0 : i32, i32, i32
  }
}

</mosaic_0001>

<llo_original>
// kernel: tpu_custom_call.1
$region0: #{tpu_custom_call.1}
  #allocation0 [shape = 'u32[]', space=smem, size = 0x4, offset = 0x4, fixed_abs, tag = 'smem constant byte address 0x4 - core index']
  #allocation1 [shape = 'u32[72,128]{1,0:T(1,128)}', space=vmem, size = 0x9000, scoped, tag = 'internal scratch']
  #allocation2 [shape = 'f32[16,1]{1,0:T(8,128)}', space=vmem, size = 0x2000, scoped, tag = 'scratch operand']
  #allocation3 [shape = 'f32[16,1]{1,0:T(8,128)}', space=vmem, size = 0x2000, scoped, tag = 'scratch operand']
  #allocation4 [shape = 'f32[16,1]{1,0:T(8,128)}', space=vmem, size = 0x2000, scoped, tag = 'scratch operand']
  #allocation5 [shape = 'f32[16,1]{1,0:T(8,128)}', space=vmem, size = 0x2000, scoped, tag = 'scratch operand']
  #allocation6 [shape = 'f32[16,1]{1,0:T(8,128)}', space=vmem, size = 0x2000, scoped, tag = 'scratch operand']
  #allocation7 [shape = 'f32[16,1]{1,0:T(8,128)}', space=vmem, size = 0x2000, scoped, tag = 'scratch operand']
  #allocation8 [shape = 'f32[16,1]{1,0:T(8,128)}', space=vmem, size = 0x2000, scoped, tag = 'scratch operand']
  #allocation9 [shape = 'f32[16,1]{1,0:T(8,128)}', space=vmem, size = 0x2000, scoped, tag = 'scratch operand']
  %s0 = inlined_call_operand.vmem [shape: s32[16,1], index: 0, kind: input, shape index: {}]
  %s1 = inlined_call_operand.vmem [shape: f32[16,128], index: 1, kind: input, shape index: {}]
  %s2 = inlined_call_operand.hbm [shape: f32[16,128], index: 2, kind: input, shape index: {}]
  %s3 = inlined_call_operand.hbm [shape: f32[1,8,128], index: 3, kind: output, shape index: {0}]
  %s4 = inlined_call_operand.hbm [shape: f32[1,8,128], index: 4, kind: output, shape index: {1}]
  %5 = xla_tuple %s3, %s4
  %s6 = sld [smem:[#allocation0]]
  $region50: #{tpu_custom_call.1} parent=0
    _
  %s8 = ssub.s32 1, %s6
  %s9 = scalar_select 0, %s8, %s6
  $region1: #{tpu_custom_call.1} parent=0
    #allocation10 [shape = 'u8[8192]{0}', space=vmem, size = 0x2000, scoped, tag = 'input window, operand 2, single buffered']
    #allocation11 [shape = 's32[1]{0}', space=sflag, size = 0x4, scoped, tag = 'scoped memory for tpu_custom_call.1']
    #allocation12 [shape = 's32[1]{0}', space=sflag, size = 0x4, scoped, tag = 'scoped memory for tpu_custom_call.1']
    #allocation13 [shape = 'u8[4096]{0}', space=vmem, size = 0x1000, scoped, tag = 'output window, operand 0, single buffered']
    #allocation14 [shape = 'u8[4096]{0}', space=vmem, size = 0x1000, scoped, tag = 'output window, operand 1, single buffered']
    #allocation15 [shape = 's32[1]{0}', space=sflag, size = 0x4, scoped, tag = 'scoped memory for tpu_custom_call.1']
    %10 = vsyncpa [#allocation11], 0
    %11 = vsyncpa [#allocation12], 0
    %12 = vsyncpa [#allocation15], 0
    // Predicated region
    $region2: #{tpu_custom_call.1} parent=1 // pred_check
      _
    $region3: #{tpu_custom_call.1} parent=1 // pred_check_branch
      %14 = sbr.rel (0) target = $region5
    $region4: #{tpu_custom_call.1} parent=1 // pred_region
      %s15 = sadd.s32 0, 0
      %p16 = scmp.lt.s32.totalorder %s15, 0
      %s17 = scalar_select %p16, %s15, 0
      %s18 = smul.u32 2, %s17
      %p19 = scmp.lt.s32.totalorder %s18, 1
      %s20 = scalar_select %p19, %s18, 1
      %s21 = smul.addr %s20, 8
      %s22 = scalar_lea.vmem %s0, %s21
      %s23 = sadd.s32 0, 0
      %p24 = scmp.lt.s32.totalorder %s23, 0
      %s25 = scalar_select %p24, %s23, 0
      %s26 = smul.u32 2, %s25
    $region5: #{tpu_custom_call.1} parent=1 // pred_fallthru
      _
    // Predicated region
    $region6: #{tpu_custom_call.1} parent=1 // pred_check
      _
    $region7: #{tpu_custom_call.1} parent=1 // pred_check_branch
      %28 = sbr.rel (0) target = $region9
    $region8: #{tpu_custom_call.1} parent=1 // pred_region
      %s29 = sadd.s32 0, 0
      %p30 = scmp.lt.s32.totalorder %s29, 0
      %s31 = scalar_select %p30, %s29, 0
      %s32 = smul.u32 2, %s31
      %p33 = scmp.lt.s32.totalorder %s32, 1
      %s34 = scalar_select %p33, %s32, 1
      %s35 = smul.addr %s34, 8
      %s36 = scalar_lea.vmem %s1, %s35
      %s37 = sadd.s32 0, 0
      %p38 = scmp.lt.s32.totalorder %s37, 0
      %s39 = scalar_select %p38, %s37, 0
      %s40 = smul.u32 2, %s39
    $region9: #{tpu_custom_call.1} parent=1 // pred_fallthru
      _
    // Predicated region
    $region10: #{tpu_custom_call.1} parent=1 // pred_check
      _
    $region11: #{tpu_custom_call.1} parent=1 // pred_check_branch
      %42 = sbr.rel (0) target = $region13
    $region12: #{tpu_custom_call.1} parent=1 // pred_region
      %s43 = sadd.s32 0, 0
      %p44 = scmp.lt.s32.totalorder %s43, 0
      %s45 = scalar_select %p44, %s43, 0
      %s46 = smul.u32 2, %s45
      %48 = vsyncadd [#allocation11], 0
      %s49 = smul.addr %s46, 8
      %s50 = scalar_lea.hbm %s2, %s49
      %s51 = sshll.u32 %s50, 4
      %s52 = int_to_ptr.hbm [resolvable:$true] %s51
      %s53 = sshll.u32 [#allocation10], 4
      %s54 = int_to_ptr.vmem [resolvable:$true] %s53
      %59 = dma.hbm_to_vmem [thread:$0]  %s52, 256, %s54, [#allocation11], 128, 128, 8
    $region13: #{tpu_custom_call.1} parent=1 // pred_fallthru
      _
    // Predicated region
    $region14: #{tpu_custom_call.1} parent=1 // pred_check
      _
    $region15: #{tpu_custom_call.1} parent=1 // pred_check_branch
      %61 = sbr.rel (0) target = $region17
    $region16: #{tpu_custom_call.1} parent=1 // pred_region
      %63 = dma.done [#allocation11], 256
    $region17: #{tpu_custom_call.1} parent=1 // pred_fallthru
      _
    %s64 = sadd.s32 0, 0
    %p65 = scmp.lt.s32.totalorder %s64, 0
    %s66 = scalar_select %p65, %s64, 0
    %s67 = smul.u32 2, %s66
    %p68 = scmp.lt.s32.totalorder %s67, 1
    %s69 = scalar_select %p68, %s67, 1
    %s70 = smul.addr %s69, 8
    %s71 = scalar_lea.vmem %s0, %s70
    %s72 = sadd.s32 0, 0
    %p73 = scmp.lt.s32.totalorder %s72, 0
    %s74 = scalar_select %p73, %s72, 0
    %s75 = smul.u32 2, %s74
    %p76 = scmp.lt.s32.totalorder %s75, 1
    %s77 = scalar_select %p76, %s75, 1
    %s78 = smul.addr %s77, 8
    %s79 = scalar_lea.vmem %s1, %s78
    %s80 = sadd.s32 0, 0
    %p81 = scmp.lt.s32.totalorder %s80, 0
    %s82 = scalar_select %p81, %s80, 0
    %s83 = smul.u32 2, %s82
    %p84 = scmp.lt.s32.totalorder %s83, 1
    %s85 = scalar_select %p84, %s83, 1
    %s86 = smul.addr %s85, 8
    %s87 = scalar_lea.vmem %s0, %s86
    %s88 = sadd.s32 0, 0
    %p89 = scmp.lt.s32.totalorder %s88, 0
    %s90 = scalar_select %p89, %s88, 0
    %s91 = smul.u32 2, %s90
    %s92 = sadd.s32 0, 0
    %p93 = scmp.lt.s32.totalorder %s92, 0
    %s94 = scalar_select %p93, %s92, 0
    %s95 = smul.u32 2, %s94
    %p96 = scmp.lt.s32.totalorder %s95, 1
    %s97 = scalar_select %p96, %s95, 1
    %s98 = smul.addr %s97, 8
    %s99 = scalar_lea.vmem %s1, %s98
    %s100 = sadd.s32 0, 0
    %p101 = scmp.lt.s32.totalorder %s100, 0
    %s102 = scalar_select %p101, %s100, 0
    %s103 = smul.u32 2, %s102
    %s104 = sadd.s32 0, 0
    %p105 = scmp.lt.s32.totalorder %s104, 0
    %s106 = scalar_select %p105, %s104, 0
    %s107 = smul.u32 2, %s106
    %p108 = scmp.eq.s32.totalorder 0, 0
    %p109 = scmp.eq.s32.totalorder 0, 0
    %p110 = pnand %p108, %p109
    %p111 = pneg %p110
    // Predicated region
    $region18: #{tpu_custom_call.1} parent=1 // pred_check
      _
    $region19: #{tpu_custom_call.1} parent=1 // pred_check_branch
      %113 = sbr.rel (%p110) target = $region21
    $region20: #{tpu_custom_call.1} parent=1 // pred_region
      %vm114 = vcmask 7168
      %115 = vst.msk [vmem:[#allocation8] sm:$0xff] %vm114, 0.0
      %116 = vst.msk [vmem:[#allocation8 + $0x8] sm:$0xff] %vm114, 0.0
      %117 = vst.msk [vmem:[#allocation9] sm:$0xff] %vm114, 0.0
      %118 = vst.msk [vmem:[#allocation9 + $0x8] sm:$0xff] %vm114, 0.0
    $region21: #{tpu_custom_call.1} parent=1 // pred_fallthru
      _
    // Predicated region
    $region22: #{tpu_custom_call.1} parent=1 // pred_check
      %p119 = pneg %p109
    $region23: #{tpu_custom_call.1} parent=1 // pred_check_branch
      %121 = sbr.rel (%p119) target = $region25
    $region24: #{tpu_custom_call.1} parent=1 // pred_region
      %vm122 = vcmask 7168
      %123 = vst.msk [vmem:[#allocation2] sm:$0xff] %vm122, -inf
      %124 = vst.msk [vmem:[#allocation2 + $0x8] sm:$0xff] %vm122, -inf
      %125 = vst.msk [vmem:[#allocation4] sm:$0xff] %vm122, -inf
      %126 = vst.msk [vmem:[#allocation4 + $0x8] sm:$0xff] %vm122, -inf
      %127 = vst.msk [vmem:[#allocation3] sm:$0xff] %vm122, 0.0
      %128 = vst.msk [vmem:[#allocation3 + $0x8] sm:$0xff] %vm122, 0.0
      %129 = vst.msk [vmem:[#allocation5] sm:$0xff] %vm122, 0.0
      %130 = vst.msk [vmem:[#allocation5 + $0x8] sm:$0xff] %vm122, 0.0
      %131 = vst.msk [vmem:[#allocation6] sm:$0xff] %vm122, 0.0
      %132 = vst.msk [vmem:[#allocation6 + $0x8] sm:$0xff] %vm122, 0.0
      %133 = vst.msk [vmem:[#allocation7] sm:$0xff] %vm122, 0.0
      %134 = vst.msk [vmem:[#allocation7 + $0x8] sm:$0xff] %vm122, 0.0
    $region25: #{tpu_custom_call.1} parent=1 // pred_fallthru
      _
    %v135 = vld [vmem:[%s99] sm:$0xff]
    %v136 = vld [vmem:[%s99 + $0x8] sm:$0xff]
    %v137 = vld [vmem:[#allocation10] sm:$0xff]
    %v138 = vld [vmem:[#allocation10 + $0x8] sm:$0xff]
    %v139 = vld [vmem:[#allocation2] sm:$0xff]
    %v140 = vld [vmem:[#allocation2 + $0x8] sm:$0xff]
    %141 = vmax.xlane.f32.xlu0 %v137
    %v142 = vpop.xlane.xlu0 %141
    %143 = vmax.xlane.f32.xlu0 %v138
    %v144 = vpop.xlane.xlu0 %143
    %v145 = vmax.f32 %v139, %v142
    %v146 = vmax.f32 %v140, %v144
    %v147 = vld [vmem:[#allocation4] sm:$0xff]
    %v148 = vld [vmem:[#allocation4 + $0x8] sm:$0xff]
    %149 = vmax.xlane.f32.xlu0 %v135
    %v150 = vpop.xlane.xlu0 %149
    %151 = vmax.xlane.f32.xlu0 %v136
    %v152 = vpop.xlane.xlu0 %151
    %v153 = vmax.f32 %v147, %v150
    %v154 = vmax.f32 %v148, %v152
    %v155 = vsub.f32 %v139, %v145
    %v156 = vsub.f32 %v140, %v146
    %v157 = vmul.f32 %v155, 1.442695
    %v158 = vpow.pop %v157
    %v159 = vmul.f32 %v156, 1.442695
    %v160 = vpow.pop %v159
    %v161 = vsub.f32 %v147, %v153
    %v162 = vsub.f32 %v148, %v154
    %v163 = vmul.f32 %v161, 1.442695
    %v164 = vpow.pop %v163
    %v165 = vmul.f32 %v162, 1.442695
    %v166 = vpow.pop %v165
    %168 = vset.pattern.permute.xlu0 0
    %169 = vperm.xlu0 %168, %v145
    %v170 = vpop.permute.xlu0 %169
    %173 = vset.pattern.permute.xlu0 0
    %174 = vperm.xlu0 %173, %v146
    %v175 = vpop.permute.xlu0 %174
    %v177 = vsub.f32 %v137, %v170
    %v178 = vsub.f32 %v138, %v175
    %v179 = vmul.f32 %v177, 1.442695
    %v180 = vpow.pop %v179
    %v181 = vmul.f32 %v178, 1.442695
    %v182 = vpow.pop %v181
    %184 = vset.pattern.permute.xlu0 0
    %185 = vperm.xlu0 %184, %v153
    %v186 = vpop.permute.xlu0 %185
    %189 = vset.pattern.permute.xlu0 0
    %190 = vperm.xlu0 %189, %v154
    %v191 = vpop.permute.xlu0 %190
    %v193 = vsub.f32 %v135, %v186
    %v194 = vsub.f32 %v136, %v191
    %v195 = vmul.f32 %v193, 1.442695
    %v196 = vpow.pop %v195
    %v197 = vmul.f32 %v194, 1.442695
    %v198 = vpow.pop %v197
    %v199 = vand.u32 2147483647, %v135
    %v200 = vand.u32 2147483647, %v136
    %vm201 = vcmp.eq.f32.partialorder %v199, inf
    %vm202 = vcmp.eq.f32.partialorder %v200, inf
    %vm203 = vmxor %vm201, 1
    %vm204 = vmxor %vm202, 1
    %v205 = vld [vmem:[#allocation3] sm:$0xff]
    %v206 = vld [vmem:[#allocation3 + $0x8] sm:$0xff]
    %v207 = vmul.f32 %v158, %v205
    %v208 = vmul.f32 %v160, %v206
    %209 = vadd.xlane.f32.xlu0 %v180
    %v210 = vpop.xlane.xlu0 %209
    %211 = vadd.xlane.f32.xlu0 %v182
    %v212 = vpop.xlane.xlu0 %211
    %v213 = vadd.f32 %v207, %v210
    %v214 = vadd.f32 %v208, %v212
    %vm215 = vcmask 7168
    %216 = vst.msk [vmem:[#allocation3] sm:$0xff] %vm215, %v213
    %217 = vst.msk [vmem:[#allocation3 + $0x8] sm:$0xff] %vm215, %v214
    %v218 = vld [vmem:[#allocation5] sm:$0xff]
    %v219 = vld [vmem:[#allocation5 + $0x8] sm:$0xff]
    %v220 = vmul.f32 %v164, %v218
    %v221 = vmul.f32 %v166, %v219
    %222 = vadd.xlane.f32.xlu0 %v196
    %v223 = vpop.xlane.xlu0 %222
    %224 = vadd.xlane.f32.xlu0 %v198
    %v225 = vpop.xlane.xlu0 %224
    %v226 = vadd.f32 %v220, %v223
    %v227 = vadd.f32 %v221, %v225
    %228 = vst.msk [vmem:[#allocation5] sm:$0xff] %vm215, %v226
    %229 = vst.msk [vmem:[#allocation5 + $0x8] sm:$0xff] %vm215, %v227
    %v230 = vld [vmem:[#allocation6] sm:$0xff]
    %v231 = vld [vmem:[#allocation6 + $0x8] sm:$0xff]
    %v232 = vmul.f32 %v158, %v230
    %v233 = vmul.f32 %v160, %v231
    %v234 = vmul.f32 %v180, %v135
    %v235 = vmul.f32 %v182, %v136
    %v236 = vsel %vm203, %v234, 0.0
    %v237 = vsel %vm204, %v235, 0.0
    %238 = vadd.xlane.f32.xlu0 %v236
    %v239 = vpop.xlane.xlu0 %238
    %240 = vadd.xlane.f32.xlu0 %v237
    %v241 = vpop.xlane.xlu0 %240
    %v242 = vadd.f32 %v232, %v239
    %v243 = vadd.f32 %v233, %v241
    %244 = vst.msk [vmem:[#allocation6] sm:$0xff] %vm215, %v242
    %245 = vst.msk [vmem:[#allocation6 + $0x8] sm:$0xff] %vm215, %v243
    %v246 = vld [vmem:[#allocation7] sm:$0xff]
    %v247 = vld [vmem:[#allocation7 + $0x8] sm:$0xff]
    %v248 = vmul.f32 %v158, %v246
    %v249 = vmul.f32 %v160, %v247
    %v250 = vsel %vm203, %v180, 0.0
    %v251 = vsel %vm204, %v182, 0.0
    %252 = vadd.xlane.f32.xlu0 %v250
    %v253 = vpop.xlane.xlu0 %252
    %254 = vadd.xlane.f32.xlu0 %v251
    %v255 = vpop.xlane.xlu0 %254
    %v256 = vadd.f32 %v248, %v253
    %v257 = vadd.f32 %v249, %v255
    %258 = vst.msk [vmem:[#allocation7] sm:$0xff] %vm215, %v256
    %259 = vst.msk [vmem:[#allocation7 + $0x8] sm:$0xff] %vm215, %v257
    %260 = vst.msk [vmem:[#allocation2] sm:$0xff] %vm215, %v145
    %261 = vst.msk [vmem:[#allocation2 + $0x8] sm:$0xff] %vm215, %v146
    %262 = vst.msk [vmem:[#allocation4] sm:$0xff] %vm215, %v153
    %263 = vst.msk [vmem:[#allocation4 + $0x8] sm:$0xff] %vm215, %v154
    // Predicated region
    $region26: #{tpu_custom_call.1} parent=1 // pred_check
      %p264 = pneg %p109
    $region27: #{tpu_custom_call.1} parent=1 // pred_check_branch
      %266 = sbr.rel (%p264) target = $region29
    $region28: #{tpu_custom_call.1} parent=1 // pred_region
      %v267 = vld [vmem:[#allocation4] sm:$0xff]
      %v268 = vld [vmem:[#allocation4 + $0x8] sm:$0xff]
      %v269 = vld [vmem:[#allocation5] sm:$0xff]
      %v270 = vld [vmem:[#allocation5 + $0x8] sm:$0xff]
      %v271 = vlog2.pop %v269
      %v272 = vmul.f32 %v271, 0.6931472
      %v273 = vlog2.pop %v270
      %v274 = vmul.f32 %v273, 0.6931472
      %v275 = vadd.f32 %v267, %v272
      %v276 = vadd.f32 %v268, %v274
      %v277 = vld [vmem:[#allocation6] sm:$0xff]
      %v278 = vld [vmem:[#allocation6 + $0x8] sm:$0xff]
      %v279 = vld [vmem:[#allocation7] sm:$0xff]
      %v280 = vld [vmem:[#allocation7 + $0x8] sm:$0xff]
      %v281 = vmul.f32 %v275, %v279
      %v282 = vmul.f32 %v276, %v280
      %v283 = vsub.f32 %v277, %v281
      %v284 = vsub.f32 %v278, %v282
      %v285 = vld [vmem:[#allocation3] sm:$0xff]
      %v286 = vld [vmem:[#allocation3 + $0x8] sm:$0xff]
      %v287 = vrcp.pop %v285
      %v288 = vmul.f32 %v285, %v287
      %v289 = vsub.f32 1.0, %v288
      %v290 = vmul.f32 %v287, %v289
      %v291 = vadd.f32 %v287, %v290
      %vm292 = vweird.f32 %v285
      %vm293 = vweird.f32 %v287
      %vm294 = vmor %vm292, %vm293
      %v295 = vsel %vm294, %v287, %v291
      %v296 = vand.u32 2147483647, %v285
      %vm297 = vcmp.eq.f32.partialorder %v296, 8.507059e+37
      %v298 = vand.u32 %v285, 2147483648
      %v299 = vor.u32 1.1754944e-38, %v298
      %v300 = vsel %vm297, %v299, %v295
      %v301 = vmul.f32 %v283, %v300
      %v302 = vrcp.pop %v286
      %v303 = vmul.f32 %v286, %v302
      %v304 = vsub.f32 1.0, %v303
      %v305 = vmul.f32 %v302, %v304
      %v306 = vadd.f32 %v302, %v305
      %vm307 = vweird.f32 %v286
      %vm308 = vweird.f32 %v302
      %vm309 = vmor %vm307, %vm308
      %v310 = vsel %vm309, %v302, %v306
      %v311 = vand.u32 2147483647, %v286
      %vm312 = vcmp.eq.f32.partialorder %v311, 8.507059e+37
      %v313 = vand.u32 %v286, 2147483648
      %v314 = vor.u32 1.1754944e-38, %v313
      %v315 = vsel %vm312, %v314, %v310
      %v316 = vmul.f32 %v284, %v315
      %s317 = sadd.s32 0, 0
      %s318 = smul.u32 %s317, 16
      %v319 = vlaneseq
      %v320 = vshrl.u32 %v319, 7
      %v321 = vadd.s32 %v320, 8
      %v322 = vstv %s318
      %v323 = vadd.s32 %v322, %v320
      %v324 = vadd.s32 %v322, %v321
      %v325 = vld [vmem:[%s87] sm:$0xff]
      %v326 = vld [vmem:[%s87 + $0x8] sm:$0xff]
      %vm327 = vcmp.lt.s32.totalorder %v323, 16
      %vm328 = vcmp.lt.s32.totalorder %v324, 16
      %vm329 = vcmp.ne.s32.totalorder %v325, 4294967196
      %vm330 = vcmp.ne.s32.totalorder %v326, 4294967196
      %vm331 = vmand %vm327, %vm329
      %vm332 = vmand %vm328, %vm330
      %v333 = vld [vmem:[#allocation8] sm:$0xff]
      %v334 = vld [vmem:[#allocation8 + $0x8] sm:$0xff]
      %v335 = vsel %vm331, %v301, 0.0
      %v336 = vsel %vm332, %v316, 0.0
      %v337 = vadd.f32 %v333, %v335
      %v338 = vadd.f32 %v334, %v336
      %339 = vst.msk [vmem:[#allocation8] sm:$0xff] %vm215, %v337
      %340 = vst.msk [vmem:[#allocation8 + $0x8] sm:$0xff] %vm215, %v338
      %v341 = vld [vmem:[#allocation9] sm:$0xff]
      %v342 = vld [vmem:[#allocation9 + $0x8] sm:$0xff]
      %v343 = vsel %vm331, 1.0, 0.0
      %v344 = vsel %vm332, 1.0, 0.0
      %v345 = vadd.f32 %v341, %v343
      %v346 = vadd.f32 %v342, %v344
      %347 = vst.msk [vmem:[#allocation9] sm:$0xff] %vm215, %v345
      %348 = vst.msk [vmem:[#allocation9 + $0x8] sm:$0xff] %vm215, %v346
    $region29: #{tpu_custom_call.1} parent=1 // pred_fallthru
      _
    // Predicated region
    $region30: #{tpu_custom_call.1} parent=1 // pred_check
      _
    $region31: #{tpu_custom_call.1} parent=1 // pred_check_branch
      %350 = sbr.rel (%p110) target = $region33
    $region32: #{tpu_custom_call.1} parent=1 // pred_region
      %v351 = vld [vmem:[#allocation8] sm:$0xff]
      %v352 = vld [vmem:[#allocation8 + $0x8] sm:$0xff]
      %v353 = vsel %vm215, %v351, 0.0
      %v354 = vsel %vm215, %v352, 0.0
      %v355 = vadd.f32 %v353, %v354
      %356 = vadd.xlane.f32.xlu0 %v355
      %v357 = vpop.xlane.xlu0 %356
      %v358 = vrot.slane %v357, 4
      %v359 = vadd.f32 %v357, %v358
      %v360 = vrot.slane %v359, 2
      %v361 = vadd.f32 %v359, %v360
      %v362 = vrot.slane %v361, 1
      %v363 = vadd.f32 %v361, %v362
      %s364 = vtos %v363
      %v365 = vstv %s364
      %366 = vst [vmem:[#allocation13] sm:$0xff] %v365
      %v367 = vld [vmem:[#allocation9] sm:$0xff]
      %v368 = vld [vmem:[#allocation9 + $0x8] sm:$0xff]
      %v369 = vsel %vm215, %v367, 0.0
      %v370 = vsel %vm215, %v368, 0.0
      %v371 = vadd.f32 %v369, %v370
      %372 = vadd.xlane.f32.xlu0 %v371
      %v373 = vpop.xlane.xlu0 %372
      %v374 = vrot.slane %v373, 4
      %v375 = vadd.f32 %v373, %v374
      %v376 = vrot.slane %v375, 2
      %v377 = vadd.f32 %v375, %v376
      %v378 = vrot.slane %v377, 1
      %v379 = vadd.f32 %v377, %v378
      %s380 = vtos %v379
      %v381 = vstv %s380
      %382 = vst [vmem:[#allocation14] sm:$0xff] %v381
    $region33: #{tpu_custom_call.1} parent=1 // pred_fallthru
      _
    // Predicated region
    $region34: #{tpu_custom_call.1} parent=1 // pred_check
      _
    $region35: #{tpu_custom_call.1} parent=1 // pred_check_branch
      %384 = sbr.rel (0) target = $region37
    $region36: #{tpu_custom_call.1} parent=1 // pred_region
      %386 = vsyncadd [#allocation12], 0
      %s388 = sshll.u32 [#allocation13], 4
      %s389 = int_to_ptr.vmem [resolvable:$true] %s388
      %s390 = sshll.u32 %s3, 4
      %s391 = int_to_ptr.hbm [resolvable:$true] %s390
      %393 = dma.vmem_to_hbm [thread:$0]  %s389, 128, %s391, [#allocation12]
    $region37: #{tpu_custom_call.1} parent=1 // pred_fallthru
      _
    // Predicated region
    $region38: #{tpu_custom_call.1} parent=1 // pred_check
      _
    $region39: #{tpu_custom_call.1} parent=1 // pred_check_branch
      %395 = sbr.rel (0) target = $region41
    $region40: #{tpu_custom_call.1} parent=1 // pred_region
      %397 = vsyncadd [#allocation15], 0
      %s399 = sshll.u32 [#allocation14], 4
      %s400 = int_to_ptr.vmem [resolvable:$true] %s399
      %s401 = sshll.u32 %s4, 4
      %s402 = int_to_ptr.hbm [resolvable:$true] %s401
      %404 = dma.vmem_to_hbm [thread:$0]  %s400, 128, %s402, [#allocation15]
    $region41: #{tpu_custom_call.1} parent=1 // pred_fallthru
      _
    // Predicated region
    $region42: #{tpu_custom_call.1} parent=1 // pred_check
      _
    $region43: #{tpu_custom_call.1} parent=1 // pred_check_branch
      %406 = sbr.rel (0) target = $region45
    $region44: #{tpu_custom_call.1} parent=1 // pred_region
      %408 = dma.done [#allocation12], 128
    $region45: #{tpu_custom_call.1} parent=1 // pred_fallthru
      _
    // Predicated region
    $region46: #{tpu_custom_call.1} parent=1 // pred_check
      _
    $region47: #{tpu_custom_call.1} parent=1 // pred_check_branch
      %410 = sbr.rel (0) target = $region49
    $region48: #{tpu_custom_call.1} parent=1 // pred_region
      %412 = dma.done [#allocation15], 128
    $region49: #{tpu_custom_call.1} parent=1 // pred_fallthru
      _
    %413 = vsyncpa [#allocation11], 1
    %414 = vsyncpa [#allocation12], 1
    %415 = vsyncpa [#allocation15], 1

</llo_original>
